<compile_context>
chip_gen: v6e
topology: v6e:2x2x1
jax: 0.10.0
libtpu: 0.0.40
codegen_flags: <defaults>
</compile_context>

<pallas_src>
import jax
import jax.numpy as jnp
from jax.experimental import pallas as pl
from jax.experimental.pallas import tpu as pltpu


def _round_up(x, m):
    return (x + m - 1) // m * m


def _lstm_cell_kernel(xh_ref, c_ref, w_ref, b_ref, hy_ref, cy_ref, acc_ref):
    """Grid = (hidden tiles, K tiles).  Shapes per block:

    xh_ref : (Bp, tk)      fused [x | h] activations, one K tile
    c_ref  : (Bp, tn)      cell state slice for this hidden tile
    w_ref  : (tk, 4*tn)    packed weights, columns = [i|f|g|o] each tn wide
    b_ref  : (1, 4*tn)     packed bias (b_xh + b_hh)
    acc_ref: (Bp, 4*tn) f32 gate accumulator, resident across the K axis
    """
    k = pl.program_id(1)

    @pl.when(k == 0)
    def _():
        acc_ref[...] = jnp.zeros_like(acc_ref)

    # Single MXU contraction per (n, k) tile; weights keep their stored dtype,
    # accumulation is forced to f32.
    acc_ref[...] += jnp.dot(xh_ref[...], w_ref[...],
                            preferred_element_type=jnp.float32)

    @pl.when(k == pl.num_programs(1) - 1)
    def _():
        gates = acc_ref[...] + b_ref[...].astype(jnp.float32)
        tn = hy_ref.shape[-1]                      # multiple of 128 -> lane-aligned
        i_t = jax.nn.sigmoid(gates[:, 0 * tn:1 * tn])
        f_t = jax.nn.sigmoid(gates[:, 1 * tn:2 * tn])
        g_t = jnp.tanh(gates[:, 2 * tn:3 * tn])
        o_t = jax.nn.sigmoid(gates[:, 3 * tn:4 * tn])
        c = c_ref[...].astype(jnp.float32)
        cy = c * f_t + i_t * g_t
        hy = o_t * jnp.tanh(cy)
        cy_ref[...] = cy.astype(cy_ref.dtype)
        hy_ref[...] = hy.astype(hy_ref.dtype)


def prepare_lstm_params(w_xh, b_xh, w_hh, b_hh, param_dtype=None):
    """One-time parameter packing (do OUTSIDE the per-step call / scan loop).

    torch layout in:  w_xh (4H, D_in), w_hh (4H, H), biases (4H,)
    packed out:       W (Kp, 4*Hp) with K = D_in + H, columns grouped per
                      hidden tile as [i|f|g|o] (each `tn` lanes), and
                      bias (1, 4*Hp) with the same interleaving.
    """
    four_h, d_in = w_xh.shape
    H = four_h // 4
    K = d_in + H

    tn = min(_round_up(H, 128), 512)     # per-gate lane tile (>=128 -> lane-dense)
    tk = min(_round_up(K, 128), 512)     # K tile (weight tile <= tk*4*tn*4B <= 4 MiB)
    Hp = _round_up(H, tn)
    Kp = _round_up(K, tk)
    n_tiles = Hp // tn

    # gates = [x|h] @ concat(w_xh.T, w_hh.T, axis=0) + (b_xh + b_hh)
    w_all = jnp.concatenate([w_xh, w_hh], axis=1).T          # (K, 4H)
    w_all = jnp.pad(w_all, ((0, Kp - K), (0, 0)))            # (Kp, 4H)
    w4 = w_all.reshape(Kp, 4, H)
    w4 = jnp.pad(w4, ((0, 0), (0, 0), (0, Hp - H)))          # (Kp, 4, Hp)
    w4 = w4.reshape(Kp, 4, n_tiles, tn).transpose(0, 2, 1, 3)
    w_packed = w4.reshape(Kp, 4 * Hp)                        # (Kp, 4*Hp)

    b = (b_xh + b_hh).reshape(4, H)
    b = jnp.pad(b, ((0, 0), (0, Hp - H)))
    b_packed = b.reshape(4, n_tiles, tn).transpose(1, 0, 2).reshape(1, 4 * Hp)

    if param_dtype is not None:
        w_packed = w_packed.astype(param_dtype)
        b_packed = b_packed.astype(param_dtype)
    return w_packed, b_packed, H, tn, tk


def lstm_cell(x, hx, cx, params):
    """One LSTM step.  `params` comes from prepare_lstm_params (packed once)."""
    w_packed, b_packed, H, tn, tk = params
    B, d_in = x.shape
    if hx is None:
        hx = jnp.zeros((B, H), x.dtype)
        cx = jnp.zeros((B, H), x.dtype)

    K = d_in + H
    Kp, four_hp = w_packed.shape
    Hp = four_hp // 4
    Bp = _round_up(B, 8)
    n_tiles = Hp // tn
    k_tiles = Kp // tk

    # Fuse the two projections: one contraction over K = D_in + H.
    xh = jnp.concatenate([x, hx], axis=1).astype(w_packed.dtype)
    xh = jnp.pad(xh, ((0, Bp - B), (0, Kp - K)))
    c_pad = jnp.pad(cx, ((0, Bp - B), (0, Hp - H)))

    hy_p, cy_p = pl.pallas_call(
        _lstm_cell_kernel,
        out_shape=(
            jax.ShapeDtypeStruct((Bp, Hp), x.dtype),
            jax.ShapeDtypeStruct((Bp, Hp), x.dtype),
        ),
        grid_spec=pltpu.PrefetchScalarGridSpec(
            num_scalar_prefetch=0,
            grid=(n_tiles, k_tiles),
            in_specs=[
                pl.BlockSpec((Bp, tk), lambda n, k: (0, k)),        # [x|h]
                pl.BlockSpec((Bp, tn), lambda n, k: (0, n)),        # cx slice
                pl.BlockSpec((tk, 4 * tn), lambda n, k: (k, n)),    # packed W
                pl.BlockSpec((1, 4 * tn), lambda n, k: (0, n)),     # packed bias
            ],
            out_specs=(
                pl.BlockSpec((Bp, tn), lambda n, k: (0, n)),        # hy
                pl.BlockSpec((Bp, tn), lambda n, k: (0, n)),        # cy
            ),
            scratch_shapes=[pltpu.VMEM((Bp, 4 * tn), jnp.float32)],
        ),
        compiler_params=pltpu.CompilerParams(
            dimension_semantics=("parallel", "arbitrary"),
            vmem_limit_bytes=48 * 1024 * 1024,
        ),
    )(xh, c_pad, w_packed, b_packed)

    return hy_p[:B, :H], cy_p[:B, :H]


def lstm_cell_ref(x, hx, cx, w_xh, b_xh, w_hh, b_hh):
    """Pure-JAX reference mirroring the PyTorch forward."""
    gates = x @ w_xh.T + b_xh + hx @ w_hh.T + b_hh
    H = hx.shape[-1]
    i_t = jax.nn.sigmoid(gates[:, 0 * H:1 * H])
    f_t = jax.nn.sigmoid(gates[:, 1 * H:2 * H])
    g_t = jnp.tanh(gates[:, 2 * H:3 * H])
    o_t = jax.nn.sigmoid(gates[:, 3 * H:4 * H])
    cy = cx * f_t + i_t * g_t
    hy = o_t * jnp.tanh(cy)
    return hy, cy


if __name__ == "__main__":
    B, D_in, H = 8, 16, 32

    key = jax.random.PRNGKey(0)
    kx, kh, kc, k1, k2, k3, k4 = jax.random.split(key, 7)

    # Deterministic parameter init mimicking reset_parameters():
    # uniform(-std, std), std = 1/sqrt(hidden_size)
    std = 1.0 / jnp.sqrt(jnp.float32(H))
    w_xh = jax.random.uniform(k1, (4 * H, D_in), jnp.float32, -std, std)
    b_xh = jax.random.uniform(k2, (4 * H,), jnp.float32, -std, std)
    w_hh = jax.random.uniform(k3, (4 * H, H), jnp.float32, -std, std)
    b_hh = jax.random.uniform(k4, (4 * H,), jnp.float32, -std, std)

    x = jax.random.normal(kx, (B, D_in), jnp.float32)
    hx = jax.random.normal(kh, (B, H), jnp.float32)
    cx = jax.random.normal(kc, (B, H), jnp.float32)

    # Pack parameters ONCE (fused weights, lane-dense gate layout).
    params = prepare_lstm_params(w_xh, b_xh, w_hh, b_hh)

    hy, cy = lstm_cell(x, hx, cx, params)
    jax.block_until_ready((hy, cy))

    hy_ref, cy_ref = lstm_cell_ref(x, hx, cx, w_xh, b_xh, w_hh, b_hh)
    assert jnp.allclose(hy, hy_ref, atol=1e-5, rtol=1e-5), "hy mismatch"
    assert jnp.allclose(cy, cy_ref, atol=1e-5, rtol=1e-5), "cy mismatch"

    # hx=None path from the PyTorch forward (zero initial state).
    hy0, cy0 = lstm_cell(x, None, None, params)
    jax.block_until_ready((hy0, cy0))
    zeros = jnp.zeros((B, H), jnp.float32)
    hy0_ref, cy0_ref = lstm_cell_ref(x, zeros, zeros, w_xh, b_xh, w_hh, b_hh)
    assert jnp.allclose(hy0, hy0_ref, atol=1e-5, rtol=1e-5), "hy0 mismatch"
    assert jnp.allclose(cy0, cy0_ref, atol=1e-5, rtol=1e-5), "cy0 mismatch"

    print("KERNEL_OK")
</pallas_src>

<mosaic_0001>
module attributes {stable_mosaic.version = 11 : i64} {
  func.func @_lstm_cell_kernel(%arg0: i32, %arg1: i32, %arg2: memref<8x128xf32, #tpu.memory_space<vmem>>, %arg3: memref<8x128xf32, #tpu.memory_space<vmem>>, %arg4: memref<128x512xf32, #tpu.memory_space<vmem>>, %arg5: memref<1x512xf32, #tpu.memory_space<vmem>>, %arg6: memref<8x128xf32, #tpu.memory_space<vmem>>, %arg7: memref<8x128xf32, #tpu.memory_space<vmem>>, %arg8: memref<8x512xf32, #tpu.memory_space<vmem>>) attributes {dimension_semantics = [#tpu.dimension_semantics<parallel>, #tpu.dimension_semantics<arbitrary>], iteration_bounds = array<i64: 1, 1>, scalar_prefetch = 0 : i64, scratch_operands = 1 : i64, tpu.core_type = #tpu.core_type<tc>, window_params = [{transform_indices = @transform_0, window_bounds = array<i64: 8, 128>}, {transform_indices = @transform_1, window_bounds = array<i64: 8, 128>}, {transform_indices = @transform_2, window_bounds = array<i64: 128, 512>}, {transform_indices = @transform_3, window_bounds = array<i64: 1, 512>}, {transform_indices = @transform_4, window_bounds = array<i64: 8, 128>}, {transform_indices = @transform_5, window_bounds = array<i64: 8, 128>}]} {
    %c0_i32 = arith.constant 0 : i32
    %0 = arith.cmpi eq, %arg1, %c0_i32 : i32
    %1 = arith.extui %0 : i1 to i32
    %c0_i32_0 = arith.constant 0 : i32
    %2 = arith.cmpi ne, %1, %c0_i32_0 : i32
    scf.if %2 {
      %cst_10 = arith.constant 0.000000e+00 : f32
      %12 = vector.broadcast %cst_10 : f32 to vector<8x512xf32>
      %c0_11 = arith.constant 0 : index
      %c0_12 = arith.constant 0 : index
      %13 = vector.load %arg8[%c0_11, %c0_12] : memref<8x512xf32, #tpu.memory_space<vmem>>, vector<8x512xf32>
      tpu.vector_store %arg8[%c0_11, %c0_12], %12 {strides = array<i32>} : memref<8x512xf32, #tpu.memory_space<vmem>>, vector<8x512xf32>,
    } else {
    }
    %c0 = arith.constant 0 : index
    %c0_1 = arith.constant 0 : index
    %3 = vector.load %arg8[%c0, %c0_1] : memref<8x512xf32, #tpu.memory_space<vmem>>, vector<8x512xf32>
    %c0_2 = arith.constant 0 : index
    %c0_3 = arith.constant 0 : index
    %4 = vector.load %arg2[%c0_2, %c0_3] : memref<8x128xf32, #tpu.memory_space<vmem>>, vector<8x128xf32>
    %c0_4 = arith.constant 0 : index
    %c0_5 = arith.constant 0 : index
    %5 = vector.load %arg4[%c0_4, %c0_5] : memref<128x512xf32, #tpu.memory_space<vmem>>, vector<128x512xf32>
    %cst = arith.constant dense<0.000000e+00> : vector<8x512xf32>
    %6 = tpu.matmul %4, %5, %cst {dimension_numbers = #tpu.dot_dimension_numbers<[1], [0], [0], [1], [0, 0, 1, 1], [], []>} : vector<8x128xf32>, vector<128x512xf32>, vector<8x512xf32> -> vector<8x512xf32>
    %7 = arith.addf %3, %6 : vector<8x512xf32>
    %c0_6 = arith.constant 0 : index
    %c0_7 = arith.constant 0 : index
    %8 = vector.load %arg8[%c0_6, %c0_7] : memref<8x512xf32, #tpu.memory_space<vmem>>, vector<8x512xf32>
    tpu.vector_store %arg8[%c0_6, %c0_7], %7 {strides = array<i32>} : memref<8x512xf32, #tpu.memory_space<vmem>>, vector<8x512xf32>,
    %c0_i32_8 = arith.constant 0 : i32
    %9 = arith.cmpi eq, %arg1, %c0_i32_8 : i32
    %10 = arith.extui %9 : i1 to i32
    %c0_i32_9 = arith.constant 0 : i32
    %11 = arith.cmpi ne, %10, %c0_i32_9 : i32
    scf.if %11 {
      %c0_10 = arith.constant 0 : index
      %c0_11 = arith.constant 0 : index
      %12 = vector.load %arg8[%c0_10, %c0_11] : memref<8x512xf32, #tpu.memory_space<vmem>>, vector<8x512xf32>
      %c0_12 = arith.constant 0 : index
      %c0_13 = arith.constant 0 : index
      %13 = vector.load %arg5[%c0_12, %c0_13] : memref<1x512xf32, #tpu.memory_space<vmem>>, vector<1x512xf32>
      %14 = vector.broadcast %13 : vector<1x512xf32> to vector<8x512xf32>
      %15 = arith.addf %12, %14 : vector<8x512xf32>
      %16 = vector.extract_strided_slice %15 {offsets = [0, 0], sizes = [8, 128], strides = [1, 1]} : vector<8x512xf32> to vector<8x128xf32>
      %17 = arith.negf %16 : vector<8x128xf32>
      %18 = math.exp %17 : vector<8x128xf32>
      %cst_14 = arith.constant 1.000000e+00 : f32
      %19 = vector.broadcast %cst_14 : f32 to vector<8x128xf32>
      %20 = arith.addf %19, %18 : vector<8x128xf32>
      %21 = arith.divf %19, %20 : vector<8x128xf32>
      %22 = vector.extract_strided_slice %15 {offsets = [0, 128], sizes = [8, 128], strides = [1, 1]} : vector<8x512xf32> to vector<8x128xf32>
      %23 = arith.negf %22 : vector<8x128xf32>
      %24 = math.exp %23 : vector<8x128xf32>
      %cst_15 = arith.constant 1.000000e+00 : f32
      %25 = vector.broadcast %cst_15 : f32 to vector<8x128xf32>
      %26 = arith.addf %25, %24 : vector<8x128xf32>
      %27 = arith.divf %25, %26 : vector<8x128xf32>
      %28 = vector.extract_strided_slice %15 {offsets = [0, 256], sizes = [8, 128], strides = [1, 1]} : vector<8x512xf32> to vector<8x128xf32>
      %29 = math.tanh %28 : vector<8x128xf32>
      %30 = vector.extract_strided_slice %15 {offsets = [0, 384], sizes = [8, 128], strides = [1, 1]} : vector<8x512xf32> to vector<8x128xf32>
      %31 = arith.negf %30 : vector<8x128xf32>
      %32 = math.exp %31 : vector<8x128xf32>
      %cst_16 = arith.constant 1.000000e+00 : f32
      %33 = vector.broadcast %cst_16 : f32 to vector<8x128xf32>
      %34 = arith.addf %33, %32 : vector<8x128xf32>
      %35 = arith.divf %33, %34 : vector<8x128xf32>
      %c0_17 = arith.constant 0 : index
      %c0_18 = arith.constant 0 : index
      %36 = vector.load %arg3[%c0_17, %c0_18] : memref<8x128xf32, #tpu.memory_space<vmem>>, vector<8x128xf32>
      %37 = arith.mulf %36, %27 : vector<8x128xf32>
      %38 = arith.mulf %21, %29 : vector<8x128xf32>
      %39 = arith.addf %37, %38 : vector<8x128xf32>
      %40 = math.tanh %39 : vector<8x128xf32>
      %41 = arith.mulf %35, %40 : vector<8x128xf32>
      %c0_19 = arith.constant 0 : index
      %c0_20 = arith.constant 0 : index
      %42 = vector.load %arg7[%c0_19, %c0_20] : memref<8x128xf32, #tpu.memory_space<vmem>>, vector<8x128xf32>
      tpu.vector_store %arg7[%c0_19, %c0_20], %39 {strides = array<i32>} : memref<8x128xf32, #tpu.memory_space<vmem>>, vector<8x128xf32>,
      %c0_21 = arith.constant 0 : index
      %c0_22 = arith.constant 0 : index
      %43 = vector.load %arg6[%c0_21, %c0_22] : memref<8x128xf32, #tpu.memory_space<vmem>>, vector<8x128xf32>
      tpu.vector_store %arg6[%c0_21, %c0_22], %41 {strides = array<i32>} : memref<8x128xf32, #tpu.memory_space<vmem>>, vector<8x128xf32>,
    } else {
    }
    return
  }
  func.func @transform_0(%arg0: i32, %arg1: i32) -> (i32, i32) {
    %c0_i32 = arith.constant 0 : i32
    %c0_i32_0 = arith.constant 0 : i32
    return %c0_i32, %arg1 : i32, i32
  }
  func.func @transform_1(%arg0: i32, %arg1: i32) -> (i32, i32) {
    %c0_i32 = arith.constant 0 : i32
    %c0_i32_0 = arith.constant 0 : i32
    return %c0_i32, %arg0 : i32, i32
  }
  func.func @transform_2(%arg0: i32, %arg1: i32) -> (i32, i32) {
    %c0_i32 = arith.constant 0 : i32
    return %arg1, %arg0 : i32, i32
  }
  func.func @transform_3(%arg0: i32, %arg1: i32) -> (i32, i32) {
    %c0_i32 = arith.constant 0 : i32
    %c0_i32_0 = arith.constant 0 : i32
    return %c0_i32, %arg0 : i32, i32
  }
  func.func @transform_4(%arg0: i32, %arg1: i32) -> (i32, i32) {
    %c0_i32 = arith.constant 0 : i32
    %c0_i32_0 = arith.constant 0 : i32
    return %c0_i32, %arg0 : i32, i32
  }
  func.func @transform_5(%arg0: i32, %arg1: i32) -> (i32, i32) {
    %c0_i32 = arith.constant 0 : i32
    %c0_i32_0 = arith.constant 0 : i32
    return %c0_i32, %arg0 : i32, i32
  }
}

</mosaic_0001>

<llo_original>
// kernel: tpu_custom_call.1
$region0: #{tpu_custom_call.1}
  #allocation0 [shape = 'u32[]', space=smem, size = 0x4, offset = 0x4, fixed_abs, tag = 'smem constant byte address 0x4 - core index']
  #allocation1 [shape = 'u32[144,128]{1,0:T(1,128)}', space=vmem, size = 0x12000, scoped, tag = 'internal scratch']
  #allocation2 [shape = 'f32[8,512]{1,0:T(8,128)}', space=vmem, size = 0x4000, scoped, tag = 'scratch operand']
  %s0 = inlined_call_operand.hbm [shape: f32[8,128], index: 0, kind: input, shape index: {}]
  %s1 = inlined_call_operand.hbm [shape: f32[8,128], index: 1, kind: input, shape index: {}]
  %s2 = inlined_call_operand.hbm [shape: f32[128,512], index: 2, kind: input, shape index: {}]
  %s3 = inlined_call_operand.vmem [shape: f32[1,512], index: 3, kind: input, shape index: {}]
  %s4 = inlined_call_operand.hbm [shape: f32[8,128], index: 4, kind: output, shape index: {0}]
  %s5 = inlined_call_operand.hbm [shape: f32[8,128], index: 5, kind: output, shape index: {1}]
  %6 = xla_tuple %s4, %s5
  %s7 = sld [smem:[#allocation0]]
  $region54: #{tpu_custom_call.1} parent=0
    _
  %s9 = ssub.s32 1, %s7
  %s10 = scalar_select 0, %s9, %s7
  $region1: #{tpu_custom_call.1} parent=0
    #allocation3 [shape = 'u8[4096]{0}', space=vmem, size = 0x1000, scoped, tag = 'input window, operand 0, single buffered']
    #allocation4 [shape = 's32[1]{0}', space=sflag, size = 0x4, scoped, tag = 'scoped memory for tpu_custom_call.1']
    #allocation5 [shape = 's32[1]{0}', space=sflag, size = 0x4, scoped, tag = 'scoped memory for tpu_custom_call.1']
    #allocation6 [shape = 'u8[4096]{0}', space=vmem, size = 0x1000, scoped, tag = 'input window, operand 1, single buffered']
    #allocation7 [shape = 's32[1]{0}', space=sflag, size = 0x4, scoped, tag = 'scoped memory for tpu_custom_call.1']
    #allocation8 [shape = 'u8[262144]{0}', space=vmem, size = 0x40000, scoped, tag = 'input window, operand 2, single buffered']
    #allocation9 [shape = 'u8[4096]{0}', space=vmem, size = 0x1000, scoped, tag = 'output window, operand 0, single buffered']
    #allocation10 [shape = 'u8[4096]{0}', space=vmem, size = 0x1000, scoped, tag = 'output window, operand 1, single buffered']
    #allocation11 [shape = 's32[1]{0}', space=sflag, size = 0x4, scoped, tag = 'scoped memory for tpu_custom_call.1']
    %11 = vsyncpa [#allocation4], 0
    %12 = vsyncpa [#allocation7], 0
    %13 = vsyncpa [#allocation5], 0
    %14 = vsyncpa [#allocation11], 0
    // Predicated region
    $region2: #{tpu_custom_call.1} parent=1 // pred_check
      _
    $region3: #{tpu_custom_call.1} parent=1 // pred_check_branch
      %16 = sbr.rel (0) target = $region5
    $region4: #{tpu_custom_call.1} parent=1 // pred_region
      %s18 = ssub.s32 128, 128
      %19 = vsyncadd [#allocation4], %s18
      %s21 = sshll.u32 [#allocation3], 4
      %s22 = int_to_ptr.vmem [resolvable:$true] %s21
      %24 = dma.hbm_to_vmem [thread:$0]  %s0, 128, %s22, [#allocation4]
    $region5: #{tpu_custom_call.1} parent=1 // pred_fallthru
      _
    // Predicated region
    $region6: #{tpu_custom_call.1} parent=1 // pred_check
      _
    $region7: #{tpu_custom_call.1} parent=1 // pred_check_branch
      %26 = sbr.rel (0) target = $region9
    $region8: #{tpu_custom_call.1} parent=1 // pred_region
      %s28 = ssub.s32 128, 128
      %29 = vsyncadd [#allocation7], %s28
      %s31 = sshll.u32 [#allocation6], 4
      %s32 = int_to_ptr.vmem [resolvable:$true] %s31
      %34 = dma.hbm_to_vmem [thread:$0]  %s1, 128, %s32, [#allocation7]
    $region9: #{tpu_custom_call.1} parent=1 // pred_fallthru
      _
    // Predicated region
    $region10: #{tpu_custom_call.1} parent=1 // pred_check
      _
    $region11: #{tpu_custom_call.1} parent=1 // pred_check_branch
      %36 = sbr.rel (0) target = $region13
    $region12: #{tpu_custom_call.1} parent=1 // pred_region
      %s38 = ssub.s32 8192, 8192
      %39 = vsyncadd [#allocation7], %s38
      %s40 = sshll.u32 [#allocation8], 4
      %s41 = int_to_ptr.vmem [resolvable:$true] %s40
      %46 = dma.hbm_to_vmem [thread:$0]  %s2, 8192, %s41, [#allocation7], 512, 512, 32
    $region13: #{tpu_custom_call.1} parent=1 // pred_fallthru
      _
    // Predicated region
    $region14: #{tpu_custom_call.1} parent=1 // pred_check
      _
    $region15: #{tpu_custom_call.1} parent=1 // pred_check_branch
      %48 = sbr.rel (0) target = $region17
    $region16: #{tpu_custom_call.1} parent=1 // pred_region
      _
    $region17: #{tpu_custom_call.1} parent=1 // pred_fallthru
      _
    // Predicated region
    $region18: #{tpu_custom_call.1} parent=1 // pred_check
      _
    $region19: #{tpu_custom_call.1} parent=1 // pred_check_branch
      %50 = sbr.rel (0) target = $region21
    $region20: #{tpu_custom_call.1} parent=1 // pred_region
      %51 = dma.done [#allocation4], 128
    $region21: #{tpu_custom_call.1} parent=1 // pred_fallthru
      _
    // Predicated region
    $region22: #{tpu_custom_call.1} parent=1 // pred_check
      _
    $region23: #{tpu_custom_call.1} parent=1 // pred_check_branch
      %53 = sbr.rel (0) target = $region25
    $region24: #{tpu_custom_call.1} parent=1 // pred_region
      %54 = dma.done [#allocation7], 128
    $region25: #{tpu_custom_call.1} parent=1 // pred_fallthru
      _
    // Predicated region
    $region26: #{tpu_custom_call.1} parent=1 // pred_check
      _
    $region27: #{tpu_custom_call.1} parent=1 // pred_check_branch
      %56 = sbr.rel (0) target = $region29
    $region28: #{tpu_custom_call.1} parent=1 // pred_region
      %57 = dma.done [#allocation7], 8192
    $region29: #{tpu_custom_call.1} parent=1 // pred_fallthru
      _
    %p58 = scmp.eq.s32.totalorder 0, 0
    // Predicated region
    $region30: #{tpu_custom_call.1} parent=1 // pred_check
      %p59 = pneg %p58
    $region31: #{tpu_custom_call.1} parent=1 // pred_check_branch
      %61 = sbr.rel (%p59) target = $region33
    $region32: #{tpu_custom_call.1} parent=1 // pred_region
      %62 = vst [vmem:[#allocation2] sm:$0xff] 0.0
      %63 = vst [vmem:[#allocation2 + $0x8] sm:$0xff] 0.0
      %64 = vst [vmem:[#allocation2 + $0x10] sm:$0xff] 0.0
      %65 = vst [vmem:[#allocation2 + $0x18] sm:$0xff] 0.0
    $region33: #{tpu_custom_call.1} parent=1 // pred_fallthru
      _
    %v66 = vld [vmem:[#allocation2] sm:$0xff]
    %v67 = vld [vmem:[#allocation2 + $0x8] sm:$0xff]
    %v68 = vld [vmem:[#allocation2 + $0x10] sm:$0xff]
    %v69 = vld [vmem:[#allocation2 + $0x18] sm:$0xff]
    %v70 = vld [vmem:[#allocation3] sm:$0xff]
    %v71 = vld [vmem:[#allocation8] sm:$0xff]
    %v72 = vld [vmem:[#allocation8 + $0x8] sm:$0xff]
    %v73 = vld [vmem:[#allocation8 + $0x10] sm:$0xff]
    %v74 = vld [vmem:[#allocation8 + $0x18] sm:$0xff]
    %v75 = vld [vmem:[#allocation8 + $0x20] sm:$0xff]
    %v76 = vld [vmem:[#allocation8 + $0x28] sm:$0xff]
    %v77 = vld [vmem:[#allocation8 + $0x30] sm:$0xff]
    %v78 = vld [vmem:[#allocation8 + $0x38] sm:$0xff]
    %v79 = vld [vmem:[#allocation8 + $0x40] sm:$0xff]
    %v80 = vld [vmem:[#allocation8 + $0x48] sm:$0xff]
    %v81 = vld [vmem:[#allocation8 + $0x50] sm:$0xff]
    %v82 = vld [vmem:[#allocation8 + $0x58] sm:$0xff]
    %v83 = vld [vmem:[#allocation8 + $0x60] sm:$0xff]
    %v84 = vld [vmem:[#allocation8 + $0x68] sm:$0xff]
    %v85 = vld [vmem:[#allocation8 + $0x70] sm:$0xff]
    %v86 = vld [vmem:[#allocation8 + $0x78] sm:$0xff]
    %v87 = vld [vmem:[#allocation8 + $0x80] sm:$0xff]
    %v88 = vld [vmem:[#allocation8 + $0x88] sm:$0xff]
    %v89 = vld [vmem:[#allocation8 + $0x90] sm:$0xff]
    %v90 = vld [vmem:[#allocation8 + $0x98] sm:$0xff]
    %v91 = vld [vmem:[#allocation8 + $0xa0] sm:$0xff]
    %v92 = vld [vmem:[#allocation8 + $0xa8] sm:$0xff]
    %v93 = vld [vmem:[#allocation8 + $0xb0] sm:$0xff]
    %v94 = vld [vmem:[#allocation8 + $0xb8] sm:$0xff]
    %v95 = vld [vmem:[#allocation8 + $0xc0] sm:$0xff]
    %v96 = vld [vmem:[#allocation8 + $0xc8] sm:$0xff]
    %v97 = vld [vmem:[#allocation8 + $0xd0] sm:$0xff]
    %v98 = vld [vmem:[#allocation8 + $0xd8] sm:$0xff]
    %v99 = vld [vmem:[#allocation8 + $0xe0] sm:$0xff]
    %v100 = vld [vmem:[#allocation8 + $0xe8] sm:$0xff]
    %v101 = vld [vmem:[#allocation8 + $0xf0] sm:$0xff]
    %v102 = vld [vmem:[#allocation8 + $0xf8] sm:$0xff]
    %v103 = vld [vmem:[#allocation8 + $0x100] sm:$0xff]
    %v104 = vld [vmem:[#allocation8 + $0x108] sm:$0xff]
    %v105 = vld [vmem:[#allocation8 + $0x110] sm:$0xff]
    %v106 = vld [vmem:[#allocation8 + $0x118] sm:$0xff]
    %v107 = vld [vmem:[#allocation8 + $0x120] sm:$0xff]
    %v108 = vld [vmem:[#allocation8 + $0x128] sm:$0xff]
    %v109 = vld [vmem:[#allocation8 + $0x130] sm:$0xff]
    %v110 = vld [vmem:[#allocation8 + $0x138] sm:$0xff]
    %v111 = vld [vmem:[#allocation8 + $0x140] sm:$0xff]
    %v112 = vld [vmem:[#allocation8 + $0x148] sm:$0xff]
    %v113 = vld [vmem:[#allocation8 + $0x150] sm:$0xff]
    %v114 = vld [vmem:[#allocation8 + $0x158] sm:$0xff]
    %v115 = vld [vmem:[#allocation8 + $0x160] sm:$0xff]
    %v116 = vld [vmem:[#allocation8 + $0x168] sm:$0xff]
    %v117 = vld [vmem:[#allocation8 + $0x170] sm:$0xff]
    %v118 = vld [vmem:[#allocation8 + $0x178] sm:$0xff]
    %v119 = vld [vmem:[#allocation8 + $0x180] sm:$0xff]
    %v120 = vld [vmem:[#allocation8 + $0x188] sm:$0xff]
    %v121 = vld [vmem:[#allocation8 + $0x190] sm:$0xff]
    %v122 = vld [vmem:[#allocation8 + $0x198] sm:$0xff]
    %v123 = vld [vmem:[#allocation8 + $0x1a0] sm:$0xff]
    %v124 = vld [vmem:[#allocation8 + $0x1a8] sm:$0xff]
    %v125 = vld [vmem:[#allocation8 + $0x1b0] sm:$0xff]
    %v126 = vld [vmem:[#allocation8 + $0x1b8] sm:$0xff]
    %v127 = vld [vmem:[#allocation8 + $0x1c0] sm:$0xff]
    %v128 = vld [vmem:[#allocation8 + $0x1c8] sm:$0xff]
    %v129 = vld [vmem:[#allocation8 + $0x1d0] sm:$0xff]
    %v130 = vld [vmem:[#allocation8 + $0x1d8] sm:$0xff]
    %v131 = vld [vmem:[#allocation8 + $0x1e0] sm:$0xff]
    %v132 = vld [vmem:[#allocation8 + $0x1e8] sm:$0xff]
    %v133 = vld [vmem:[#allocation8 + $0x1f0] sm:$0xff]
    %v134 = vld [vmem:[#allocation8 + $0x1f8] sm:$0xff]
    %135 = vmatprep.subr.mxu0 %v132
    %136 = vmatpush1.msra.mxu0 %v131
    %137 = vmatprep.subr.mxu0 %v128
    %138 = vmatpush1.msra.mxu0 %v127
    %139 = vmatprep.subr.mxu0 %v124
    %140 = vmatpush1.msra.mxu0 %v123
    %141 = vmatprep.subr.mxu0 %v120
    %142 = vmatpush1.msra.mxu0 %v119
    %143 = vmatprep.subr.mxu0 %v116
    %144 = vmatpush1.msra.mxu0 %v115
    %145 = vmatprep.subr.mxu0 %v112
    %146 = vmatpush1.msra.mxu0 %v111
    %147 = vmatprep.subr.mxu0 %v108
    %148 = vmatpush1.msra.mxu0 %v107
    %149 = vmatprep.subr.mxu0 %v104
    %150 = vmatpush1.msra.mxu0 %v103
    %151 = vmatprep.subr.mxu0 %v100
    %152 = vmatpush1.msra.mxu0 %v99
    %153 = vmatprep.subr.mxu0 %v96
    %154 = vmatpush1.msra.mxu0 %v95
    %155 = vmatprep.subr.mxu0 %v92
    %156 = vmatpush1.msra.mxu0 %v91
    %157 = vmatprep.subr.mxu0 %v88
    %158 = vmatpush1.msra.mxu0 %v87
    %159 = vmatprep.subr.mxu0 %v84
    %160 = vmatpush1.msra.mxu0 %v83
    %161 = vmatprep.subr.mxu0 %v80
    %162 = vmatpush1.msra.mxu0 %v79
    %163 = vmatprep.subr.mxu0 %v76
    %164 = vmatpush1.msra.mxu0 %v75
    %165 = vmatprep.subr.mxu0 %v72
    %166 = vmatpush1.msra.mxu0 %v71
    %167 = vmatprep.subr.mxu0 0.0
    %168 = vmatpush2.msra.mxu0 0.0
    %169 = vmatprep.subr.mxu0 0.0
    %170 = vmatpush2.msra.mxu0 0.0
    %171 = vmatprep.subr.mxu0 0.0
    %172 = vmatpush2.msra.mxu0 0.0
    %173 = vmatprep.subr.mxu0 0.0
    %174 = vmatpush2.msra.mxu0 0.0
    %175 = vmatprep.subr.mxu0 0.0
    %176 = vmatpush2.msra.mxu0 0.0
    %177 = vmatprep.subr.mxu0 0.0
    %178 = vmatpush2.msra.mxu0 0.0
    %179 = vmatprep.subr.mxu0 0.0
    %180 = vmatpush2.msra.mxu0 0.0
    %181 = vmatprep.subr.mxu0 0.0
    %182 = vmatpush2.msra.mxu0 0.0
    %183 = vmatprep.subr.mxu0 0.0
    %184 = vmatpush2.msra.mxu0 0.0
    %185 = vmatprep.subr.mxu0 0.0
    %186 = vmatpush2.msra.mxu0 0.0
    %187 = vmatprep.subr.mxu0 0.0
    %188 = vmatpush2.msra.mxu0 0.0
    %189 = vmatprep.subr.mxu0 0.0
    %190 = vmatpush2.msra.mxu0 0.0
    %191 = vmatprep.subr.mxu0 0.0
    %192 = vmatpush2.msra.mxu0 0.0
    %193 = vmatprep.subr.mxu0 0.0
    %194 = vmatpush2.msra.mxu0 0.0
    %195 = vmatprep.subr.mxu0 0.0
    %196 = vmatpush2.msra.mxu0 0.0
    %197 = vmatprep.subr.mxu0 0.0
    %198 = vmatpush2.msra.mxu0 0.0
    %199 = vmatprep.mubr.f32.mxu0 0.0
    %200 = vmatmul.mubr.f32.gmra.mxu0 %v70
    %v201 = vpop.f32.mrf.mxu0
    %v202 = vadd.f32 0.0, %v201
    %v203 = vpop.f32.mrf.mxu0
    %v204 = vadd.f32 0.0, %v203
    %205 = vdwg.mxu0
    %206 = vmatprep.subr.mxu0 %v134
    %207 = vmatpush1.msra.mxu0 %v133
    %208 = vmatprep.subr.mxu0 %v130
    %209 = vmatpush1.msra.mxu0 %v129
    %210 = vmatprep.subr.mxu0 %v126
    %211 = vmatpush1.msra.mxu0 %v125
    %212 = vmatprep.subr.mxu0 %v122
    %213 = vmatpush1.msra.mxu0 %v121
    %214 = vmatprep.subr.mxu0 %v118
    %215 = vmatpush1.msra.mxu0 %v117
    %216 = vmatprep.subr.mxu0 %v114
    %217 = vmatpush1.msra.mxu0 %v113
    %218 = vmatprep.subr.mxu0 %v110
    %219 = vmatpush1.msra.mxu0 %v109
    %220 = vmatprep.subr.mxu0 %v106
    %221 = vmatpush1.msra.mxu0 %v105
    %222 = vmatprep.subr.mxu0 %v102
    %223 = vmatpush1.msra.mxu0 %v101
    %224 = vmatprep.subr.mxu0 %v98
    %225 = vmatpush1.msra.mxu0 %v97
    %226 = vmatprep.subr.mxu0 %v94
    %227 = vmatpush1.msra.mxu0 %v93
    %228 = vmatprep.subr.mxu0 %v90
    %229 = vmatpush1.msra.mxu0 %v89
    %230 = vmatprep.subr.mxu0 %v86
    %231 = vmatpush1.msra.mxu0 %v85
    %232 = vmatprep.subr.mxu0 %v82
    %233 = vmatpush1.msra.mxu0 %v81
    %234 = vmatprep.subr.mxu0 %v78
    %235 = vmatpush1.msra.mxu0 %v77
    %236 = vmatprep.subr.mxu0 %v74
    %237 = vmatpush1.msra.mxu0 %v73
    %238 = vmatprep.subr.mxu0 0.0
    %239 = vmatpush2.msra.mxu0 0.0
    %240 = vmatprep.subr.mxu0 0.0
    %241 = vmatpush2.msra.mxu0 0.0
    %242 = vmatprep.subr.mxu0 0.0
    %243 = vmatpush2.msra.mxu0 0.0
    %244 = vmatprep.subr.mxu0 0.0
    %245 = vmatpush2.msra.mxu0 0.0
    %246 = vmatprep.subr.mxu0 0.0
    %247 = vmatpush2.msra.mxu0 0.0
    %248 = vmatprep.subr.mxu0 0.0
    %249 = vmatpush2.msra.mxu0 0.0
    %250 = vmatprep.subr.mxu0 0.0
    %251 = vmatpush2.msra.mxu0 0.0
    %252 = vmatprep.subr.mxu0 0.0
    %253 = vmatpush2.msra.mxu0 0.0
    %254 = vmatprep.subr.mxu0 0.0
    %255 = vmatpush2.msra.mxu0 0.0
    %256 = vmatprep.subr.mxu0 0.0
    %257 = vmatpush2.msra.mxu0 0.0
    %258 = vmatprep.subr.mxu0 0.0
    %259 = vmatpush2.msra.mxu0 0.0
    %260 = vmatprep.subr.mxu0 0.0
    %261 = vmatpush2.msra.mxu0 0.0
    %262 = vmatprep.subr.mxu0 0.0
    %263 = vmatpush2.msra.mxu0 0.0
    %264 = vmatprep.subr.mxu0 0.0
    %265 = vmatpush2.msra.mxu0 0.0
    %266 = vmatprep.subr.mxu0 0.0
    %267 = vmatpush2.msra.mxu0 0.0
    %268 = vmatprep.subr.mxu0 0.0
    %269 = vmatpush2.msra.mxu0 0.0
    %270 = vmatprep.mubr.f32.mxu0 0.0
    %271 = vmatmul.mubr.f32.gmra.mxu0 %v70
    %v272 = vpop.f32.mrf.mxu0
    %v273 = vadd.f32 0.0, %v272
    %v274 = vpop.f32.mrf.mxu0
    %v275 = vadd.f32 0.0, %v274
    %276 = vdwg.mxu0
    %v277 = vadd.f32 %v66, %v202
    %v278 = vadd.f32 %v67, %v204
    %v279 = vadd.f32 %v68, %v273
    %v280 = vadd.f32 %v69, %v275
    %281 = vst [vmem:[#allocation2] sm:$0xff] %v277
    %282 = vst [vmem:[#allocation2 + $0x8] sm:$0xff] %v278
    %283 = vst [vmem:[#allocation2 + $0x10] sm:$0xff] %v279
    %284 = vst [vmem:[#allocation2 + $0x18] sm:$0xff] %v280
    // Predicated region
    $region34: #{tpu_custom_call.1} parent=1 // pred_check
      %p285 = pneg %p58
    $region35: #{tpu_custom_call.1} parent=1 // pred_check_branch
      %287 = sbr.rel (%p285) target = $region37
    $region36: #{tpu_custom_call.1} parent=1 // pred_region
      %v288 = vld [vmem:[#allocation2] sm:$0xff]
      %v289 = vld [vmem:[#allocation2 + $0x8] sm:$0xff]
      %v290 = vld [vmem:[#allocation2 + $0x10] sm:$0xff]
      %v291 = vld [vmem:[#allocation2 + $0x18] sm:$0xff]
      %v292 = vld [vmem:[%s3] sm:$0xf]
      %v294 = vlaneseq
      %v295 = vshrl.u32 %v294, 7
      %v296 = vsub.s32 0, %v295
      %v297 = vrot.slane %v292, %v296
      %v298 = vlaneseq
      %v299 = vshrl.u32 %v298, 7
      %v300 = vsub.s32 1, %v299
      %v301 = vrot.slane %v292, %v300
      %v302 = vlaneseq
      %v303 = vshrl.u32 %v302, 7
      %v304 = vsub.s32 2, %v303
      %v305 = vrot.slane %v292, %v304
      %v306 = vlaneseq
      %v307 = vshrl.u32 %v306, 7
      %v308 = vsub.s32 3, %v307
      %v309 = vrot.slane %v292, %v308
      %v314 = vadd.f32 %v288, %v297
      %v315 = vadd.f32 %v289, %v301
      %v316 = vadd.f32 %v290, %v305
      %v317 = vadd.f32 %v291, %v309
      %v318 = vxor.u32 %v314, 2147483648
      %v319 = vmul.f32 %v318, 1.442695
      %v320 = vpow.pop %v319
      %v321 = vadd.f32 %v320, 1.0
      %v322 = vrcp.pop %v321
      %v323 = vmul.f32 1.0, %v322
      %v324 = vxor.u32 %v315, 2147483648
      %v325 = vmul.f32 %v324, 1.442695
      %v326 = vpow.pop %v325
      %v327 = vadd.f32 %v326, 1.0
      %v328 = vrcp.pop %v327
      %v329 = vmul.f32 1.0, %v328
      %v330 = vtanh.pop %v316
      %v331 = vxor.u32 %v317, 2147483648
      %v332 = vmul.f32 %v331, 1.442695
      %v333 = vpow.pop %v332
      %v334 = vadd.f32 %v333, 1.0
      %v335 = vrcp.pop %v334
      %v336 = vmul.f32 1.0, %v335
      %v337 = vld [vmem:[#allocation6] sm:$0xff]
      %v338 = vmul.f32 %v337, %v329
      %v339 = vmul.f32 %v323, %v330
      %v340 = vadd.f32 %v338, %v339
      %v341 = vtanh.pop %v340
      %v342 = vmul.f32 %v336, %v341
      %343 = vst [vmem:[#allocation10] sm:$0xff] %v340
      %344 = vst [vmem:[#allocation9] sm:$0xff] %v342
    $region37: #{tpu_custom_call.1} parent=1 // pred_fallthru
      _
    // Predicated region
    $region38: #{tpu_custom_call.1} parent=1 // pred_check
      _
    $region39: #{tpu_custom_call.1} parent=1 // pred_check_branch
      %346 = sbr.rel (0) target = $region41
    $region40: #{tpu_custom_call.1} parent=1 // pred_region
      %s348 = ssub.s32 128, 128
      %349 = vsyncadd [#allocation5], %s348
      %s351 = sshll.u32 [#allocation9], 4
      %s352 = int_to_ptr.vmem [resolvable:$true] %s351
      %354 = dma.vmem_to_hbm [thread:$0]  %s352, 128, %s4, [#allocation5]
    $region41: #{tpu_custom_call.1} parent=1 // pred_fallthru
      _
    // Predicated region
    $region42: #{tpu_custom_call.1} parent=1 // pred_check
      _
    $region43: #{tpu_custom_call.1} parent=1 // pred_check_branch
      %356 = sbr.rel (0) target = $region45
    $region44: #{tpu_custom_call.1} parent=1 // pred_region
      %s358 = ssub.s32 128, 128
      %359 = vsyncadd [#allocation11], %s358
      %s361 = sshll.u32 [#allocation10], 4
      %s362 = int_to_ptr.vmem [resolvable:$true] %s361
      %364 = dma.vmem_to_hbm [thread:$0]  %s362, 128, %s5, [#allocation11]
    $region45: #{tpu_custom_call.1} parent=1 // pred_fallthru
      _
    // Predicated region
    $region46: #{tpu_custom_call.1} parent=1 // pred_check
      _
    $region47: #{tpu_custom_call.1} parent=1 // pred_check_branch
      %366 = sbr.rel (0) target = $region49
    $region48: #{tpu_custom_call.1} parent=1 // pred_region
      %367 = dma.done [#allocation5], 128
    $region49: #{tpu_custom_call.1} parent=1 // pred_fallthru
      _
    // Predicated region
    $region50: #{tpu_custom_call.1} parent=1 // pred_check
      _
    $region51: #{tpu_custom_call.1} parent=1 // pred_check_branch
      %369 = sbr.rel (0) target = $region53
    $region52: #{tpu_custom_call.1} parent=1 // pred_region
      %370 = dma.done [#allocation11], 128
    $region53: #{tpu_custom_call.1} parent=1 // pred_fallthru
      _
    %371 = vsyncpa [#allocation4], 1
    %372 = vsyncpa [#allocation7], 1
    %373 = vsyncpa [#allocation5], 1
    %374 = vsyncpa [#allocation11], 1

</llo_original>
